<compile_context>
chip_gen: v5e
topology: v5e:2x2
jax: 0.10.0
libtpu: 0.0.40
codegen_flags: <defaults>
</compile_context>

<pallas_src>
import functools

import jax
import jax.numpy as jnp
import numpy as np
from jax.experimental import pallas as pl
from jax.experimental.pallas import tpu as pltpu

LANE = 128


def _dot(a, b):
    # bf16 operands -> single-pass MXU on every generation; f32 accumulation.
    return jnp.dot(a.astype(jnp.bfloat16), b.astype(jnp.bfloat16),
                   preferred_element_type=jnp.float32)


# --------------------------- fused Pallas kernel ---------------------------

def fused_graphnet_kernel(
        aT_ref, xT_ref, w1T_ref, w2T_ref, m1T_ref, m2T_ref, bias_ref,
        gsT_ref, gdT_ref, o_ref, *, hidden, mlp_hidden):
    h, m = hidden, mlp_hidden
    # packed biases: [b1 | b2 | mb1 | mb2] along the sublane axis, f32
    b1T = bias_ref[0:h, :]                       # [H, 1]
    b2T = bias_ref[h:2 * h, :]                   # [H, 1]
    mb1T = bias_ref[2 * h:2 * h + m, :]          # [M, 1]
    mb2 = bias_ref[2 * h + m:2 * h + m + 1, :]   # [1, 1]

    aT = aT_ref[...]                             # [N, N] = A_norm^T (bf16)

    # ---- SAGEConv 1 + ReLU (dropout p=0.1 is identity at inference) ----
    # merged projection: w1T = [W_l^T ; W_r^T] -> one MXU matmul, sublane split.
    p1 = _dot(w1T_ref[...], xT_ref[...])                                     # [2H, N]
    h1 = jnp.maximum(_dot(p1[:h, :], aT) + p1[h:, :] + b1T, 0.0)             # [H, N]

    # ---- SAGEConv 2 + ReLU ----
    p2 = _dot(w2T_ref[...], h1)                                              # [2H, N]
    h2 = jnp.maximum(_dot(p2[:h, :], aT) + p2[h:, :] + b2T, 0.0)             # [H, N]

    # ---- edge gather (one-hot matmul on VMEM-resident h2) + merged edge MLP ----
    # TODO(synk): for realistic E, replace the dense one-hot gather with a
    # scalar-prefetched edge-block gather (PrefetchScalarGridSpec / manual DMA).
    hs = _dot(h2, gsT_ref[...])                                              # [H, tE]
    hd = _dot(h2, gdT_ref[...])                                              # [H, tE]
    hsd = jnp.concatenate([hs, hd], axis=0)                                  # [2H, tE]
    z = jnp.maximum(_dot(m1T_ref[...], hsd) + mb1T, 0.0)                     # [M, tE]
    o_ref[...] = _dot(m2T_ref[...], z) + mb2                                 # [1, tE]


# ------------------------------ graph glue ---------------------------------

def build_graph_operators(edge_index, num_nodes, e_pad):
    """Dense operators derived from edge_index (built once per graph, XLA glue).

    TODO(synk): on v5e/v6e the one-hot operators could be int8 (native MXU int
    path); bf16 kept here so the same code hits the MXU fast path on v7x too.
    """
    src, dst = edge_index[0], edge_index[1]
    n, e = num_nodes, edge_index.shape[1]
    a = jnp.zeros((n, n), jnp.float32).at[dst, src].add(1.0)
    deg = a.sum(axis=1, keepdims=True)
    a_norm = a / jnp.maximum(deg, 1.0)           # mean aggregation (0 for isolated nodes)
    cols = jnp.arange(e)
    gsrcT = jnp.zeros((n, e_pad), jnp.float32).at[src, cols].set(1.0)   # [N, E_pad]
    gdstT = jnp.zeros((n, e_pad), jnp.float32).at[dst, cols].set(1.0)   # [N, E_pad]
    return (a_norm.T.astype(jnp.bfloat16),
            gsrcT.astype(jnp.bfloat16),
            gdstT.astype(jnp.bfloat16))


def prepare_kernel_params(params):
    """Transpose / stack / pack the weights once; bf16 matmul operands, f32 biases."""
    h = params["wl1"].shape[1]
    m = params["mw1"].shape[1]
    # keep the p[:h]/p[h:] sublane split and packed-bias offsets tile-aligned
    assert h % 8 == 0 and m % 8 == 0, "hidden / mlp_hidden must be multiples of 8"
    biases = jnp.concatenate(
        [params["b1"].T, params["b2"].T, params["mb1"].T, params["mb2"]],
        axis=0).astype(jnp.float32)                                       # [2H+M+1, 1]
    return dict(
        w1T=jnp.concatenate([params["wl1"].T, params["wr1"].T], axis=0).astype(jnp.bfloat16),  # [2H, F]
        w2T=jnp.concatenate([params["wl2"].T, params["wr2"].T], axis=0).astype(jnp.bfloat16),  # [2H, H]
        m1T=params["mw1"].T.astype(jnp.bfloat16),                          # [M, 2H]
        m2T=params["mw2"].T.astype(jnp.bfloat16),                          # [1, M]
        biases=biases,
    )


def graphnet_forward(params, x, edge_index, *, edge_tile=512):
    n = x.shape[0]
    e = edge_index.shape[1]
    hidden = params["wl1"].shape[1]
    mlp_hidden = params["mw1"].shape[1]

    # lane-aligned edge tile; pad E up to a multiple of the tile
    tE = max(LANE, min(edge_tile, ((e + LANE - 1) // LANE) * LANE))
    tE = (tE // LANE) * LANE
    e_pad = ((e + tE - 1) // tE) * tE
    grid = (e_pad // tE,)

    aT, gsrcT, gdstT = build_graph_operators(edge_index, n, e_pad)
    kp = prepare_kernel_params(params)
    xT = x.T.astype(jnp.bfloat16)

    def full_spec(arr):
        # whole-array block, same block every grid step (no re-DMA across steps)
        return pl.BlockSpec(arr.shape, lambda j: (0, 0))

    kernel = functools.partial(fused_graphnet_kernel,
                               hidden=hidden, mlp_hidden=mlp_hidden)

    pred_row = pl.pallas_call(
        kernel,
        out_shape=jax.ShapeDtypeStruct((1, e_pad), jnp.float32),
        grid=grid,
        in_specs=[
            full_spec(aT), full_spec(xT),
            full_spec(kp["w1T"]), full_spec(kp["w2T"]),
            full_spec(kp["m1T"]), full_spec(kp["m2T"]),
            full_spec(kp["biases"]),
            pl.BlockSpec((n, tE), lambda j: (0, j)),     # gather operators: edge-blocked
            pl.BlockSpec((n, tE), lambda j: (0, j)),
        ],
        out_specs=pl.BlockSpec((1, tE), lambda j: (0, j)),  # lane-dense output row
        compiler_params=pltpu.CompilerParams(
            dimension_semantics=("parallel",),           # v7x: 2 TCs split edge blocks
            vmem_limit_bytes=32 * 1024 * 1024,           # v5e default scoped is only 16 MiB
        ),
    )(aT, xT, kp["w1T"], kp["w2T"], kp["m1T"], kp["m2T"], kp["biases"],
      gsrcT, gdstT)

    return pred_row[0, :e]                               # .view(-1)


# ---------------- pure-JAX reference (node-major, mirrors the PyTorch module) ----

def graphnet_reference(params, x, edge_index):
    n = x.shape[0]
    src, dst = edge_index[0], edge_index[1]
    a = jnp.zeros((n, n), jnp.float32).at[dst, src].add(1.0)
    deg = a.sum(axis=1, keepdims=True)
    a_norm = a / jnp.maximum(deg, 1.0)

    def layer(hin, wl, wr, b):
        return jax.nn.relu((a_norm @ hin) @ wl + hin @ wr + b)

    h = layer(x, params["wl1"], params["wr1"], params["b1"])
    h = layer(h, params["wl2"], params["wr2"], params["b2"])
    ef = jnp.concatenate([h[src], h[dst]], axis=-1)
    h1 = jax.nn.relu(ef @ params["mw1"] + params["mb1"])
    return (h1 @ params["mw2"] + params["mb2"]).reshape(-1)


# ---------------- deterministic parameter init ----------------

def init_params(key, num_node_features, hidden, mlp_hidden, num_classes=1):
    ks = jax.random.split(key, 10)

    def lin(k, fin, fout):
        return (jax.random.normal(k, (fin, fout), jnp.float32) / jnp.sqrt(fin)).astype(jnp.float32)

    def bias(k, fout):
        return (0.01 * jax.random.normal(k, (1, fout), jnp.float32)).astype(jnp.float32)

    return {
        # conv1 (SAGEConv: lin_l has bias, lin_r has no bias)
        "wl1": lin(ks[0], num_node_features, hidden),
        "wr1": lin(ks[1], num_node_features, hidden),
        "b1": bias(ks[2], hidden),
        # conv2
        "wl2": lin(ks[3], hidden, hidden),
        "wr2": lin(ks[4], hidden, hidden),
        "b2": bias(ks[5], hidden),
        # mlp: Linear(2H -> M) -> ReLU -> Linear(M -> num_classes)
        "mw1": lin(ks[6], 2 * hidden, mlp_hidden),
        "mb1": bias(ks[7], mlp_hidden),
        "mw2": lin(ks[8], mlp_hidden, num_classes),
        "mb2": bias(ks[9], num_classes),
    }


if __name__ == "__main__":
    # small shapes consistent with the module
    N_NODES = 16
    NUM_NODE_FEATURES = 4
    HIDDEN = 32
    MLP_HIDDEN = 64
    N_EDGES = 24

    key = jax.random.PRNGKey(0)
    k_params, k_x, k_e = jax.random.split(key, 3)

    params = init_params(k_params, NUM_NODE_FEATURES, HIDDEN, MLP_HIDDEN, num_classes=1)
    x = jax.random.normal(k_x, (N_NODES, NUM_NODE_FEATURES), jnp.float32)
    edge_index = jax.random.randint(k_e, (2, N_EDGES), 0, N_NODES, dtype=jnp.int32)

    out = jax.block_until_ready(graphnet_forward(params, x, edge_index))

    # high-accuracy f32 gold (scoped, not a process-wide config change)
    with jax.default_matmul_precision("highest"):
        ref = jax.block_until_ready(graphnet_reference(params, x, edge_index))

    assert out.shape == (N_EDGES,), out.shape
    out_np, ref_np = np.asarray(out), np.asarray(ref)
    # bf16 matmul operands -> scale-relative tolerance vs the f32 reference
    scale = max(1.0, float(np.max(np.abs(ref_np))))
    max_err = float(np.max(np.abs(out_np - ref_np)))
    assert max_err <= 5e-2 * scale, f"mismatch vs reference: max_err={max_err}, scale={scale}"

    print("KERNEL_OK")
</pallas_src>

<mosaic_0001>
module attributes {stable_mosaic.version = 11 : i64} {
  func.func @fused_graphnet_kernel(%arg0: i32, %arg1: memref<16x16xbf16, #tpu.memory_space<vmem>>, %arg2: memref<4x16xbf16, #tpu.memory_space<vmem>>, %arg3: memref<64x4xbf16, #tpu.memory_space<vmem>>, %arg4: memref<64x32xbf16, #tpu.memory_space<vmem>>, %arg5: memref<64x64xbf16, #tpu.memory_space<vmem>>, %arg6: memref<1x64xbf16, #tpu.memory_space<vmem>>, %arg7: memref<129x1xf32, #tpu.memory_space<vmem>>, %arg8: memref<16x128xbf16, #tpu.memory_space<vmem>>, %arg9: memref<16x128xbf16, #tpu.memory_space<vmem>>, %arg10: memref<1x128xf32, #tpu.memory_space<vmem>>) attributes {dimension_semantics = [#tpu.dimension_semantics<parallel>], iteration_bounds = array<i64: 1>, scalar_prefetch = 0 : i64, scratch_operands = 0 : i64, tpu.core_type = #tpu.core_type<tc>, window_params = [{pipeline_mode = #tpu.pipeline_mode<synchronous>, transform_indices = @transform_0, window_bounds = array<i64: 16, 16>}, {pipeline_mode = #tpu.pipeline_mode<synchronous>, transform_indices = @transform_1, window_bounds = array<i64: 4, 16>}, {pipeline_mode = #tpu.pipeline_mode<synchronous>, transform_indices = @transform_2, window_bounds = array<i64: 64, 4>}, {pipeline_mode = #tpu.pipeline_mode<synchronous>, transform_indices = @transform_3, window_bounds = array<i64: 64, 32>}, {pipeline_mode = #tpu.pipeline_mode<synchronous>, transform_indices = @transform_4, window_bounds = array<i64: 64, 64>}, {pipeline_mode = #tpu.pipeline_mode<synchronous>, transform_indices = @transform_5, window_bounds = array<i64: 1, 64>}, {pipeline_mode = #tpu.pipeline_mode<synchronous>, transform_indices = @transform_6, window_bounds = array<i64: 129, 1>}, {transform_indices = @transform_7, window_bounds = array<i64: 16, 128>}, {transform_indices = @transform_8, window_bounds = array<i64: 16, 128>}, {transform_indices = @transform_9, window_bounds = array<i64: 1, 128>}]} {
    %c0 = arith.constant 0 : index
    %c0_0 = arith.constant 0 : index
    %0 = vector.load %arg7[%c0, %c0_0] : memref<129x1xf32, #tpu.memory_space<vmem>>, vector<32x1xf32>
    %c32 = arith.constant 32 : index
    %c0_1 = arith.constant 0 : index
    %1 = vector.load %arg7[%c32, %c0_1] : memref<129x1xf32, #tpu.memory_space<vmem>>, vector<32x1xf32>
    %c64 = arith.constant 64 : index
    %c0_2 = arith.constant 0 : index
    %2 = vector.load %arg7[%c64, %c0_2] : memref<129x1xf32, #tpu.memory_space<vmem>>, vector<64x1xf32>
    %c128 = arith.constant 128 : index
    %c0_3 = arith.constant 0 : index
    %3 = vector.load %arg7[%c128, %c0_3] : memref<129x1xf32, #tpu.memory_space<vmem>>, vector<1x1xf32>
    %c0_4 = arith.constant 0 : index
    %c0_5 = arith.constant 0 : index
    %4 = vector.load %arg1[%c0_4, %c0_5] : memref<16x16xbf16, #tpu.memory_space<vmem>>, vector<16x16xbf16>
    %c0_6 = arith.constant 0 : index
    %c0_7 = arith.constant 0 : index
    %5 = vector.load %arg3[%c0_6, %c0_7] : memref<64x4xbf16, #tpu.memory_space<vmem>>, vector<64x4xbf16>
    %c0_8 = arith.constant 0 : index
    %c0_9 = arith.constant 0 : index
    %6 = vector.load %arg2[%c0_8, %c0_9] : memref<4x16xbf16, #tpu.memory_space<vmem>>, vector<4x16xbf16>
    %cst = arith.constant dense<0.000000e+00> : vector<64x16xf32>
    %7 = tpu.matmul %5, %6, %cst {dimension_numbers = #tpu.dot_dimension_numbers<[1], [0], [0], [1], [0, 0, 1, 1], [], []>} : vector<64x4xbf16>, vector<4x16xbf16>, vector<64x16xf32> -> vector<64x16xf32>
    %8 = vector.extract_strided_slice %7 {offsets = [0, 0], sizes = [32, 16], strides = [1, 1]} : vector<64x16xf32> to vector<32x16xf32>
    %9 = arith.truncf %8 : vector<32x16xf32> to vector<32x16xbf16>
    %cst_10 = arith.constant dense<0.000000e+00> : vector<32x16xf32>
    %10 = tpu.matmul %9, %4, %cst_10 {dimension_numbers = #tpu.dot_dimension_numbers<[1], [0], [0], [1], [0, 0, 1, 1], [], []>} : vector<32x16xbf16>, vector<16x16xbf16>, vector<32x16xf32> -> vector<32x16xf32>
    %11 = vector.extract_strided_slice %7 {offsets = [32, 0], sizes = [32, 16], strides = [1, 1]} : vector<64x16xf32> to vector<32x16xf32>
    %12 = arith.addf %10, %11 : vector<32x16xf32>
    %13 = vector.broadcast %0 : vector<32x1xf32> to vector<32x16xf32>
    %14 = arith.addf %12, %13 : vector<32x16xf32>
    %cst_11 = arith.constant 0.000000e+00 : f32
    %15 = vector.broadcast %cst_11 : f32 to vector<32x16xf32>
    %16 = arith.maximumf %14, %15 : vector<32x16xf32>
    %c0_12 = arith.constant 0 : index
    %c0_13 = arith.constant 0 : index
    %17 = vector.load %arg4[%c0_12, %c0_13] : memref<64x32xbf16, #tpu.memory_space<vmem>>, vector<64x32xbf16>
    %18 = arith.truncf %16 : vector<32x16xf32> to vector<32x16xbf16>
    %cst_14 = arith.constant dense<0.000000e+00> : vector<64x16xf32>
    %19 = tpu.matmul %17, %18, %cst_14 {dimension_numbers = #tpu.dot_dimension_numbers<[1], [0], [0], [1], [0, 0, 1, 1], [], []>} : vector<64x32xbf16>, vector<32x16xbf16>, vector<64x16xf32> -> vector<64x16xf32>
    %20 = vector.extract_strided_slice %19 {offsets = [0, 0], sizes = [32, 16], strides = [1, 1]} : vector<64x16xf32> to vector<32x16xf32>
    %21 = arith.truncf %20 : vector<32x16xf32> to vector<32x16xbf16>
    %cst_15 = arith.constant dense<0.000000e+00> : vector<32x16xf32>
    %22 = tpu.matmul %21, %4, %cst_15 {dimension_numbers = #tpu.dot_dimension_numbers<[1], [0], [0], [1], [0, 0, 1, 1], [], []>} : vector<32x16xbf16>, vector<16x16xbf16>, vector<32x16xf32> -> vector<32x16xf32>
    %23 = vector.extract_strided_slice %19 {offsets = [32, 0], sizes = [32, 16], strides = [1, 1]} : vector<64x16xf32> to vector<32x16xf32>
    %24 = arith.addf %22, %23 : vector<32x16xf32>
    %25 = vector.broadcast %1 : vector<32x1xf32> to vector<32x16xf32>
    %26 = arith.addf %24, %25 : vector<32x16xf32>
    %cst_16 = arith.constant 0.000000e+00 : f32
    %27 = vector.broadcast %cst_16 : f32 to vector<32x16xf32>
    %28 = arith.maximumf %26, %27 : vector<32x16xf32>
    %c0_17 = arith.constant 0 : index
    %c0_18 = arith.constant 0 : index
    %29 = vector.load %arg8[%c0_17, %c0_18] : memref<16x128xbf16, #tpu.memory_space<vmem>>, vector<16x128xbf16>
    %30 = arith.truncf %28 : vector<32x16xf32> to vector<32x16xbf16>
    %cst_19 = arith.constant dense<0.000000e+00> : vector<32x128xf32>
    %31 = tpu.matmul %30, %29, %cst_19 {dimension_numbers = #tpu.dot_dimension_numbers<[1], [0], [0], [1], [0, 0, 1, 1], [], []>} : vector<32x16xbf16>, vector<16x128xbf16>, vector<32x128xf32> -> vector<32x128xf32>
    %c0_20 = arith.constant 0 : index
    %c0_21 = arith.constant 0 : index
    %32 = vector.load %arg9[%c0_20, %c0_21] : memref<16x128xbf16, #tpu.memory_space<vmem>>, vector<16x128xbf16>
    %33 = arith.truncf %28 : vector<32x16xf32> to vector<32x16xbf16>
    %cst_22 = arith.constant dense<0.000000e+00> : vector<32x128xf32>
    %34 = tpu.matmul %33, %32, %cst_22 {dimension_numbers = #tpu.dot_dimension_numbers<[1], [0], [0], [1], [0, 0, 1, 1], [], []>} : vector<32x16xbf16>, vector<16x128xbf16>, vector<32x128xf32> -> vector<32x128xf32>
    %35 = tpu.concatenate %31, %34 in 0 : vector<32x128xf32>, vector<32x128xf32> -> vector<64x128xf32>
    %c0_23 = arith.constant 0 : index
    %c0_24 = arith.constant 0 : index
    %36 = vector.load %arg5[%c0_23, %c0_24] : memref<64x64xbf16, #tpu.memory_space<vmem>>, vector<64x64xbf16>
    %37 = arith.truncf %35 : vector<64x128xf32> to vector<64x128xbf16>
    %cst_25 = arith.constant dense<0.000000e+00> : vector<64x128xf32>
    %38 = tpu.matmul %36, %37, %cst_25 {dimension_numbers = #tpu.dot_dimension_numbers<[1], [0], [0], [1], [0, 0, 1, 1], [], []>} : vector<64x64xbf16>, vector<64x128xbf16>, vector<64x128xf32> -> vector<64x128xf32>
    %39 = vector.broadcast %2 : vector<64x1xf32> to vector<64x128xf32>
    %40 = arith.addf %38, %39 : vector<64x128xf32>
    %cst_26 = arith.constant 0.000000e+00 : f32
    %41 = vector.broadcast %cst_26 : f32 to vector<64x128xf32>
    %42 = arith.maximumf %40, %41 : vector<64x128xf32>
    %c0_27 = arith.constant 0 : index
    %c0_28 = arith.constant 0 : index
    %43 = vector.load %arg6[%c0_27, %c0_28] : memref<1x64xbf16, #tpu.memory_space<vmem>>, vector<1x64xbf16>
    %44 = arith.truncf %42 : vector<64x128xf32> to vector<64x128xbf16>
    %cst_29 = arith.constant dense<0.000000e+00> : vector<1x128xf32>
    %45 = tpu.matmul %43, %44, %cst_29 {dimension_numbers = #tpu.dot_dimension_numbers<[1], [0], [0], [1], [0, 0, 1, 1], [], []>} : vector<1x64xbf16>, vector<64x128xbf16>, vector<1x128xf32> -> vector<1x128xf32>
    %46 = vector.broadcast %3 : vector<1x1xf32> to vector<1x128xf32>
    %47 = arith.addf %45, %46 : vector<1x128xf32>
    %c0_30 = arith.constant 0 : index
    %c0_31 = arith.constant 0 : index
    %48 = vector.load %arg10[%c0_30, %c0_31] : memref<1x128xf32, #tpu.memory_space<vmem>>, vector<1x128xf32>
    tpu.vector_store %arg10[%c0_30, %c0_31], %47 {strides = array<i32>} : memref<1x128xf32, #tpu.memory_space<vmem>>, vector<1x128xf32>,
    return
  }
  func.func @transform_0(%arg0: i32) -> (i32, i32) {
    %c0_i32 = arith.constant 0 : i32
    %c0_i32_0 = arith.constant 0 : i32
    %c0_i32_1 = arith.constant 0 : i32
    return %c0_i32, %c0_i32_0 : i32, i32
  }
  func.func @transform_1(%arg0: i32) -> (i32, i32) {
    %c0_i32 = arith.constant 0 : i32
    %c0_i32_0 = arith.constant 0 : i32
    %c0_i32_1 = arith.constant 0 : i32
    return %c0_i32, %c0_i32_0 : i32, i32
  }
  func.func @transform_2(%arg0: i32) -> (i32, i32) {
    %c0_i32 = arith.constant 0 : i32
    %c0_i32_0 = arith.constant 0 : i32
    %c0_i32_1 = arith.constant 0 : i32
    return %c0_i32, %c0_i32_0 : i32, i32
  }
  func.func @transform_3(%arg0: i32) -> (i32, i32) {
    %c0_i32 = arith.constant 0 : i32
    %c0_i32_0 = arith.constant 0 : i32
    %c0_i32_1 = arith.constant 0 : i32
    return %c0_i32, %c0_i32_0 : i32, i32
  }
  func.func @transform_4(%arg0: i32) -> (i32, i32) {
    %c0_i32 = arith.constant 0 : i32
    %c0_i32_0 = arith.constant 0 : i32
    %c0_i32_1 = arith.constant 0 : i32
    return %c0_i32, %c0_i32_0 : i32, i32
  }
  func.func @transform_5(%arg0: i32) -> (i32, i32) {
    %c0_i32 = arith.constant 0 : i32
    %c0_i32_0 = arith.constant 0 : i32
    %c0_i32_1 = arith.constant 0 : i32
    return %c0_i32, %c0_i32_0 : i32, i32
  }
  func.func @transform_6(%arg0: i32) -> (i32, i32) {
    %c0_i32 = arith.constant 0 : i32
    %c0_i32_0 = arith.constant 0 : i32
    %c0_i32_1 = arith.constant 0 : i32
    return %c0_i32, %c0_i32_0 : i32, i32
  }
  func.func @transform_7(%arg0: i32) -> (i32, i32) {
    %c0_i32 = arith.constant 0 : i32
    %c0_i32_0 = arith.constant 0 : i32
    return %c0_i32, %arg0 : i32, i32
  }
  func.func @transform_8(%arg0: i32) -> (i32, i32) {
    %c0_i32 = arith.constant 0 : i32
    %c0_i32_0 = arith.constant 0 : i32
    return %c0_i32, %arg0 : i32, i32
  }
  func.func @transform_9(%arg0: i32) -> (i32, i32) {
    %c0_i32 = arith.constant 0 : i32
    %c0_i32_0 = arith.constant 0 : i32
    return %c0_i32, %arg0 : i32, i32
  }
}

</mosaic_0001>

<llo_original>
// kernel: tpu_custom_call.1
$region0: #{tpu_custom_call.1}
  #allocation0 [shape = 'u32[]', space=smem, size = 0x4, offset = 0x4, fixed_abs, tag = 'smem constant byte address 0x4 - core index']
  #allocation1 [shape = 'u32[72,128]{1,0:T(1,128)}', space=vmem, size = 0x9000, scoped, tag = 'internal scratch']
  %s0 = inlined_call_operand.vmem [shape: bf16[16,16], index: 0, kind: input, shape index: {}]
  %s1 = inlined_call_operand.vmem [shape: bf16[4,16], index: 1, kind: input, shape index: {}]
  %s2 = inlined_call_operand.vmem [shape: bf16[64,4], index: 2, kind: input, shape index: {}]
  %s3 = inlined_call_operand.vmem [shape: bf16[64,32], index: 3, kind: input, shape index: {}]
  %s4 = inlined_call_operand.vmem [shape: bf16[64,64], index: 4, kind: input, shape index: {}]
  %s5 = inlined_call_operand.vmem [shape: bf16[1,64], index: 5, kind: input, shape index: {}]
  %s6 = inlined_call_operand.vmem [shape: f32[129,1], index: 6, kind: input, shape index: {}]
  %s7 = inlined_call_operand.vmem [shape: bf16[16,128], index: 7, kind: input, shape index: {}]
  %s8 = inlined_call_operand.vmem [shape: bf16[16,128], index: 8, kind: input, shape index: {}]
  %s9 = inlined_call_operand.hbm [shape: f32[1,128], index: 9, kind: output, shape index: {}]
  %s10 = sld [smem:[#allocation0]]
  $region46: #{tpu_custom_call.1} parent=0
    _
  %s12 = ssub.s32 1, %s10
  %s13 = scalar_select 0, %s12, %s10
  $region1: #{tpu_custom_call.1} parent=0
    #allocation2 [shape = 'u8[512]{0}', space=vmem, size = 0x400, scoped, tag = 'output window, operand 0, single buffered']
    #allocation3 [shape = 's32[1]{0}', space=sflag, size = 0x4, scoped, tag = 'scoped memory for tpu_custom_call.1']
    %14 = vsyncpa [#allocation3], 0
    // Predicated region
    $region2: #{tpu_custom_call.1} parent=1 // pred_check
      _
    $region3: #{tpu_custom_call.1} parent=1 // pred_check_branch
      %16 = sbr.rel (0) target = $region5
    $region4: #{tpu_custom_call.1} parent=1 // pred_region
      _
    $region5: #{tpu_custom_call.1} parent=1 // pred_fallthru
      _
    // Predicated region
    $region6: #{tpu_custom_call.1} parent=1 // pred_check
      _
    $region7: #{tpu_custom_call.1} parent=1 // pred_check_branch
      %18 = sbr.rel (0) target = $region9
    $region8: #{tpu_custom_call.1} parent=1 // pred_region
      _
    $region9: #{tpu_custom_call.1} parent=1 // pred_fallthru
      _
    // Predicated region
    $region10: #{tpu_custom_call.1} parent=1 // pred_check
      _
    $region11: #{tpu_custom_call.1} parent=1 // pred_check_branch
      %20 = sbr.rel (0) target = $region13
    $region12: #{tpu_custom_call.1} parent=1 // pred_region
      _
    $region13: #{tpu_custom_call.1} parent=1 // pred_fallthru
      _
    // Predicated region
    $region14: #{tpu_custom_call.1} parent=1 // pred_check
      _
    $region15: #{tpu_custom_call.1} parent=1 // pred_check_branch
      %22 = sbr.rel (0) target = $region17
    $region16: #{tpu_custom_call.1} parent=1 // pred_region
      _
    $region17: #{tpu_custom_call.1} parent=1 // pred_fallthru
      _
    // Predicated region
    $region18: #{tpu_custom_call.1} parent=1 // pred_check
      _
    $region19: #{tpu_custom_call.1} parent=1 // pred_check_branch
      %24 = sbr.rel (0) target = $region21
    $region20: #{tpu_custom_call.1} parent=1 // pred_region
      _
    $region21: #{tpu_custom_call.1} parent=1 // pred_fallthru
      _
    // Predicated region
    $region22: #{tpu_custom_call.1} parent=1 // pred_check
      _
    $region23: #{tpu_custom_call.1} parent=1 // pred_check_branch
      %26 = sbr.rel (0) target = $region25
    $region24: #{tpu_custom_call.1} parent=1 // pred_region
      _
    $region25: #{tpu_custom_call.1} parent=1 // pred_fallthru
      _
    // Predicated region
    $region26: #{tpu_custom_call.1} parent=1 // pred_check
      _
    $region27: #{tpu_custom_call.1} parent=1 // pred_check_branch
      %28 = sbr.rel (0) target = $region29
    $region28: #{tpu_custom_call.1} parent=1 // pred_region
      _
    $region29: #{tpu_custom_call.1} parent=1 // pred_fallthru
      _
    // Predicated region
    $region30: #{tpu_custom_call.1} parent=1 // pred_check
      _
    $region31: #{tpu_custom_call.1} parent=1 // pred_check_branch
      %30 = sbr.rel (0) target = $region33
    $region32: #{tpu_custom_call.1} parent=1 // pred_region
      _
    $region33: #{tpu_custom_call.1} parent=1 // pred_fallthru
      _
    // Predicated region
    $region34: #{tpu_custom_call.1} parent=1 // pred_check
      _
    $region35: #{tpu_custom_call.1} parent=1 // pred_check_branch
      %32 = sbr.rel (0) target = $region37
    $region36: #{tpu_custom_call.1} parent=1 // pred_region
      _
    $region37: #{tpu_custom_call.1} parent=1 // pred_fallthru
      _
    %v34 = vld [vmem:[%s6] sm:$0xff]
    %v35 = vld [vmem:[%s6 + $0x8] sm:$0xff]
    %v36 = vld [vmem:[%s6 + $0x10] sm:$0xff]
    %v37 = vld [vmem:[%s6 + $0x18] sm:$0xff]
    %v38 = vld [vmem:[%s6 + $0x20] sm:$0xff]
    %v39 = vld [vmem:[%s6 + $0x28] sm:$0xff]
    %v40 = vld [vmem:[%s6 + $0x30] sm:$0xff]
    %v41 = vld [vmem:[%s6 + $0x38] sm:$0xff]
    %v42 = vld [vmem:[%s6 + $0x40] sm:$0xff]
    %v43 = vld [vmem:[%s6 + $0x48] sm:$0xff]
    %v44 = vld [vmem:[%s6 + $0x50] sm:$0xff]
    %v45 = vld [vmem:[%s6 + $0x58] sm:$0xff]
    %v46 = vld [vmem:[%s6 + $0x60] sm:$0xff]
    %v47 = vld [vmem:[%s6 + $0x68] sm:$0xff]
    %v48 = vld [vmem:[%s6 + $0x70] sm:$0xff]
    %v49 = vld [vmem:[%s6 + $0x78] sm:$0xff]
    %v50 = vld [vmem:[%s6 + $0x80] sm:$0x1]
    %v51 = vld [vmem:[%s0] sm:$0xf]
    %v52 = vld [vmem:[%s0 + $0x4] sm:$0xf]
    %v53 = vld [vmem:[%s2] sm:$0xf]
    %v54 = vld [vmem:[%s2 + $0x4] sm:$0xf]
    %v55 = vld [vmem:[%s2 + $0x8] sm:$0xf]
    %v56 = vld [vmem:[%s2 + $0xc] sm:$0xf]
    %v57 = vld [vmem:[%s2 + $0x10] sm:$0xf]
    %v58 = vld [vmem:[%s2 + $0x14] sm:$0xf]
    %v59 = vld [vmem:[%s2 + $0x18] sm:$0xf]
    %v60 = vld [vmem:[%s2 + $0x1c] sm:$0xf]
    %v61 = vld [vmem:[%s1] sm:$0x3]
    %v70 = vunpack.c.l.b16 %v53
    %v71 = vunpack.c.l.b16 %v54
    %v72 = vunpack.c.l.b16 %v55
    %v73 = vunpack.c.l.b16 %v56
    %v74 = vunpack.c.l.b16 %v57
    %v75 = vunpack.c.l.b16 %v58
    %v76 = vunpack.c.l.b16 %v59
    %v77 = vunpack.c.l.b16 %v60
    %v78 = vpack.c.b16 %v71, %v70
    %v79 = vpack.c.b16 %v73, %v72
    %v80 = vpack.c.b16 %v75, %v74
    %v81 = vpack.c.b16 %v77, %v76
    %vm82 = vcmask 31744
    %v84 = vsel %vm82, %v78, 0
    %v87 = vsel %vm82, %v79, 0
    %v90 = vsel %vm82, %v80, 0
    %v93 = vsel %vm82, %v81, 0
    %vm95 = vcmask 1041408
    %v97 = vsel %vm95, %v61, 0
    %99 = vmatpush.bf16.msra.mxu0 0
    %100 = vmatpush.bf16.msra.mxu0 0
    %101 = vmatpush.bf16.msra.mxu0 0
    %102 = vmatpush.bf16.msra.mxu0 0
    %103 = vmatpush.bf16.msra.mxu0 0
    %104 = vmatpush.bf16.msra.mxu0 0
    %105 = vmatpush.bf16.msra.mxu0 0
    %106 = vmatpush.bf16.msra.mxu0 %v97
    %107 = vmatmul.bf16.gmra.mxu0 %v84
    %v108 = vpop.f32.mrf.mxu0
    %v109 = vadd.f32 0.0, %v108
    %v110 = vpop.f32.mrf.mxu0
    %v111 = vadd.f32 0.0, %v110
    %112 = vmatmul.bf16.gmra.mxu0 %v87
    %v113 = vpop.f32.mrf.mxu0
    %v114 = vadd.f32 0.0, %v113
    %v115 = vpop.f32.mrf.mxu0
    %v116 = vadd.f32 0.0, %v115
    %117 = vmatmul.bf16.gmra.mxu0 %v90
    %v118 = vpop.f32.mrf.mxu0
    %v119 = vadd.f32 0.0, %v118
    %v120 = vpop.f32.mrf.mxu0
    %v121 = vadd.f32 0.0, %v120
    %122 = vmatmul.bf16.gmra.mxu0 %v93
    %v123 = vpop.f32.mrf.mxu0
    %v124 = vadd.f32 0.0, %v123
    %v125 = vpop.f32.mrf.mxu0
    %v126 = vadd.f32 0.0, %v125
    %127 = vdwg.mxu0
    %v128 = vpack.c.bf16 %v111, %v109
    %v129 = vpack.c.bf16 %v116, %v114
    %v132 = vunpack.c.l.b16 %v51
    %v133 = vunpack.c.l.b16 %v52
    %v134 = vpack.c.b16 %v133, %v132
    %vm136 = vcmask 130048
    %v138 = vsel %vm136, %v128, 0
    %v141 = vsel %vm136, %v129, 0
    %143 = vmatpush.bf16.msra.mxu0 0
    %144 = vmatpush.bf16.msra.mxu0 0
    %145 = vmatpush.bf16.msra.mxu0 0
    %146 = vmatpush.bf16.msra.mxu0 0
    %147 = vmatpush.bf16.msra.mxu0 0
    %148 = vmatpush.bf16.msra.mxu0 0
    %149 = vmatpush.bf16.msra.mxu0 0
    %150 = vmatpush.bf16.msra.mxu0 %v134
    %151 = vmatmul.bf16.gmra.mxu0 %v138
    %v152 = vpop.f32.mrf.mxu0
    %v153 = vadd.f32 %v119, %v152
    %v154 = vpop.f32.mrf.mxu0
    %v155 = vadd.f32 %v121, %v154
    %156 = vmatmul.bf16.gmra.mxu0 %v141
    %v157 = vpop.f32.mrf.mxu0
    %v158 = vadd.f32 %v124, %v157
    %v159 = vpop.f32.mrf.mxu0
    %v160 = vadd.f32 %v126, %v159
    %161 = vdwg.mxu0
    %163 = vset.pattern.permute.xlu0 0
    %164 = vperm.xlu0 %163, %v34
    %v165 = vpop.permute.xlu0 %164
    %168 = vset.pattern.permute.xlu0 0
    %169 = vperm.xlu0 %168, %v35
    %v170 = vpop.permute.xlu0 %169
    %173 = vset.pattern.permute.xlu0 0
    %174 = vperm.xlu0 %173, %v36
    %v175 = vpop.permute.xlu0 %174
    %178 = vset.pattern.permute.xlu0 0
    %179 = vperm.xlu0 %178, %v37
    %v180 = vpop.permute.xlu0 %179
    %v182 = vadd.f32 %v153, %v165
    %v183 = vadd.f32 %v155, %v170
    %v184 = vadd.f32 %v158, %v175
    %v185 = vadd.f32 %v160, %v180
    %v186 = vmax.f32 %v182, 0.0
    %v187 = vmax.f32 %v183, 0.0
    %v188 = vmax.f32 %v184, 0.0
    %v189 = vmax.f32 %v185, 0.0
    %v190 = vld [vmem:[%s3] sm:$0xf]
    %v191 = vld [vmem:[%s3 + $0x4] sm:$0xf]
    %v192 = vld [vmem:[%s3 + $0x8] sm:$0xf]
    %v193 = vld [vmem:[%s3 + $0xc] sm:$0xf]
    %v194 = vld [vmem:[%s3 + $0x10] sm:$0xf]
    %v195 = vld [vmem:[%s3 + $0x14] sm:$0xf]
    %v196 = vld [vmem:[%s3 + $0x18] sm:$0xf]
    %v197 = vld [vmem:[%s3 + $0x1c] sm:$0xf]
    %v198 = vpack.c.bf16 %v187, %v186
    %v199 = vpack.c.bf16 %v189, %v188
    %v208 = vunpack.c.l.b16 %v190
    %v209 = vunpack.c.l.b16 %v191
    %v210 = vunpack.c.l.b16 %v192
    %v211 = vunpack.c.l.b16 %v193
    %v212 = vunpack.c.l.b16 %v194
    %v213 = vunpack.c.l.b16 %v195
    %v214 = vunpack.c.l.b16 %v196
    %v215 = vunpack.c.l.b16 %v197
    %v216 = vpack.c.b16 %v209, %v208
    %v217 = vpack.c.b16 %v211, %v210
    %v218 = vpack.c.b16 %v213, %v212
    %v219 = vpack.c.b16 %v215, %v214
    %vm220 = vcmask 261120
    %v222 = vsel %vm220, %v216, 0
    %v225 = vsel %vm220, %v217, 0
    %v228 = vsel %vm220, %v218, 0
    %v231 = vsel %vm220, %v219, 0
    %233 = vmatpush.bf16.msra.mxu0 0
    %234 = vmatpush.bf16.msra.mxu0 0
    %235 = vmatpush.bf16.msra.mxu0 0
    %236 = vmatpush.bf16.msra.mxu0 0
    %237 = vmatpush.bf16.msra.mxu0 0
    %238 = vmatpush.bf16.msra.mxu0 0
    %239 = vmatpush.bf16.msra.mxu0 %v199
    %240 = vmatpush.bf16.msra.mxu0 %v198
    %241 = vmatmul.bf16.gmra.mxu0 %v222
    %v242 = vpop.f32.mrf.mxu0
    %v243 = vadd.f32 0.0, %v242
    %v244 = vpop.f32.mrf.mxu0
    %v245 = vadd.f32 0.0, %v244
    %246 = vmatmul.bf16.gmra.mxu0 %v225
    %v247 = vpop.f32.mrf.mxu0
    %v248 = vadd.f32 0.0, %v247
    %v249 = vpop.f32.mrf.mxu0
    %v250 = vadd.f32 0.0, %v249
    %251 = vmatmul.bf16.gmra.mxu0 %v228
    %v252 = vpop.f32.mrf.mxu0
    %v253 = vadd.f32 0.0, %v252
    %v254 = vpop.f32.mrf.mxu0
    %v255 = vadd.f32 0.0, %v254
    %256 = vmatmul.bf16.gmra.mxu0 %v231
    %v257 = vpop.f32.mrf.mxu0
    %v258 = vadd.f32 0.0, %v257
    %v259 = vpop.f32.mrf.mxu0
    %v260 = vadd.f32 0.0, %v259
    %261 = vdwg.mxu0
    %v262 = vpack.c.bf16 %v245, %v243
    %v263 = vpack.c.bf16 %v250, %v248
    %v265 = vsel %vm136, %v262, 0
    %v268 = vsel %vm136, %v263, 0
    %270 = vmatpush.bf16.msra.mxu0 0
    %271 = vmatpush.bf16.msra.mxu0 0
    %272 = vmatpush.bf16.msra.mxu0 0
    %273 = vmatpush.bf16.msra.mxu0 0
    %274 = vmatpush.bf16.msra.mxu0 0
    %275 = vmatpush.bf16.msra.mxu0 0
    %276 = vmatpush.bf16.msra.mxu0 0
    %277 = vmatpush.bf16.msra.mxu0 %v134
    %278 = vmatmul.bf16.gmra.mxu0 %v265
    %v279 = vpop.f32.mrf.mxu0
    %v280 = vadd.f32 %v253, %v279
    %v281 = vpop.f32.mrf.mxu0
    %v282 = vadd.f32 %v255, %v281
    %283 = vmatmul.bf16.gmra.mxu0 %v268
    %v284 = vpop.f32.mrf.mxu0
    %v285 = vadd.f32 %v258, %v284
    %v286 = vpop.f32.mrf.mxu0
    %v287 = vadd.f32 %v260, %v286
    %288 = vdwg.mxu0
    %290 = vset.pattern.permute.xlu0 0
    %291 = vperm.xlu0 %290, %v38
    %v292 = vpop.permute.xlu0 %291
    %295 = vset.pattern.permute.xlu0 0
    %296 = vperm.xlu0 %295, %v39
    %v297 = vpop.permute.xlu0 %296
    %300 = vset.pattern.permute.xlu0 0
    %301 = vperm.xlu0 %300, %v40
    %v302 = vpop.permute.xlu0 %301
    %305 = vset.pattern.permute.xlu0 0
    %306 = vperm.xlu0 %305, %v41
    %v307 = vpop.permute.xlu0 %306
    %v309 = vadd.f32 %v280, %v292
    %v310 = vadd.f32 %v282, %v297
    %v311 = vadd.f32 %v285, %v302
    %v312 = vadd.f32 %v287, %v307
    %v313 = vmax.f32 %v309, 0.0
    %v314 = vmax.f32 %v310, 0.0
    %v315 = vmax.f32 %v311, 0.0
    %v316 = vmax.f32 %v312, 0.0
    %v317 = vld [vmem:[%s7] sm:$0xf]
    %v318 = vld [vmem:[%s7 + $0x4] sm:$0xf]
    %v319 = vpack.c.bf16 %v314, %v313
    %v320 = vpack.c.bf16 %v316, %v315
    %v323 = vunpack.c.l.b16 %v317
    %v324 = vunpack.c.l.b16 %v318
    %v325 = vpack.c.b16 %v324, %v323
    %v328 = vsel %vm136, %v319, 0
    %v331 = vsel %vm136, %v320, 0
    %333 = vmatpush.bf16.msra.mxu0 0
    %334 = vmatpush.bf16.msra.mxu0 0
    %335 = vmatpush.bf16.msra.mxu0 0
    %336 = vmatpush.bf16.msra.mxu0 0
    %337 = vmatpush.bf16.msra.mxu0 0
    %338 = vmatpush.bf16.msra.mxu0 0
    %339 = vmatpush.bf16.msra.mxu0 0
    %340 = vmatpush.bf16.msra.mxu0 %v325
    %341 = vmatmul.bf16.gmra.mxu0 %v328
    %v342 = vpop.f32.mrf.mxu0
    %v343 = vadd.f32 0.0, %v342
    %v344 = vpop.f32.mrf.mxu0
    %v345 = vadd.f32 0.0, %v344
    %346 = vmatmul.bf16.gmra.mxu0 %v331
    %v347 = vpop.f32.mrf.mxu0
    %v348 = vadd.f32 0.0, %v347
    %v349 = vpop.f32.mrf.mxu0
    %v350 = vadd.f32 0.0, %v349
    %351 = vdwg.mxu0
    %v352 = vld [vmem:[%s8] sm:$0xf]
    %v353 = vld [vmem:[%s8 + $0x4] sm:$0xf]
    %v356 = vunpack.c.l.b16 %v352
    %v357 = vunpack.c.l.b16 %v353
    %v358 = vpack.c.b16 %v357, %v356
    %360 = vmatpush.bf16.msra.mxu0 0
    %361 = vmatpush.bf16.msra.mxu0 0
    %362 = vmatpush.bf16.msra.mxu0 0
    %363 = vmatpush.bf16.msra.mxu0 0
    %364 = vmatpush.bf16.msra.mxu0 0
    %365 = vmatpush.bf16.msra.mxu0 0
    %366 = vmatpush.bf16.msra.mxu0 0
    %367 = vmatpush.bf16.msra.mxu0 %v358
    %368 = vmatmul.bf16.gmra.mxu0 %v328
    %v369 = vpop.f32.mrf.mxu0
    %v370 = vadd.f32 0.0, %v369
    %v371 = vpop.f32.mrf.mxu0
    %v372 = vadd.f32 0.0, %v371
    %373 = vmatmul.bf16.gmra.mxu0 %v331
    %v374 = vpop.f32.mrf.mxu0
    %v375 = vadd.f32 0.0, %v374
    %v376 = vpop.f32.mrf.mxu0
    %v377 = vadd.f32 0.0, %v376
    %378 = vdwg.mxu0
    %v379 = vld [vmem:[%s4] sm:$0xf]
    %v380 = vld [vmem:[%s4 + $0x4] sm:$0xf]
    %v381 = vld [vmem:[%s4 + $0x8] sm:$0xf]
    %v382 = vld [vmem:[%s4 + $0xc] sm:$0xf]
    %v383 = vld [vmem:[%s4 + $0x10] sm:$0xf]
    %v384 = vld [vmem:[%s4 + $0x14] sm:$0xf]
    %v385 = vld [vmem:[%s4 + $0x18] sm:$0xf]
    %v386 = vld [vmem:[%s4 + $0x1c] sm:$0xf]
    %v387 = vpack.c.bf16 %v345, %v343
    %v388 = vpack.c.bf16 %v350, %v348
    %v389 = vpack.c.bf16 %v372, %v370
    %v390 = vpack.c.bf16 %v377, %v375
    %392 = vset.pattern.permute.xlu0 0
    %393 = vperm.xlu0 %392, %v42
    %v394 = vpop.permute.xlu0 %393
    %397 = vset.pattern.permute.xlu0 0
    %398 = vperm.xlu0 %397, %v43
    %v399 = vpop.permute.xlu0 %398
    %402 = vset.pattern.permute.xlu0 0
    %403 = vperm.xlu0 %402, %v44
    %v404 = vpop.permute.xlu0 %403
    %407 = vset.pattern.permute.xlu0 0
    %408 = vperm.xlu0 %407, %v45
    %v409 = vpop.permute.xlu0 %408
    %412 = vset.pattern.permute.xlu0 0
    %413 = vperm.xlu0 %412, %v46
    %v414 = vpop.permute.xlu0 %413
    %417 = vset.pattern.permute.xlu0 0
    %418 = vperm.xlu0 %417, %v47
    %v419 = vpop.permute.xlu0 %418
    %422 = vset.pattern.permute.xlu0 0
    %423 = vperm.xlu0 %422, %v48
    %v424 = vpop.permute.xlu0 %423
    %427 = vset.pattern.permute.xlu0 0
    %428 = vperm.xlu0 %427, %v49
    %v429 = vpop.permute.xlu0 %428
    %v439 = vunpack.c.l.b16 %v379
    %v440 = vunpack.c.l.b16 %v380
    %v441 = vunpack.c.l.b16 %v381
    %v442 = vunpack.c.l.b16 %v382
    %v443 = vunpack.c.l.b16 %v383
    %v444 = vunpack.c.l.b16 %v384
    %v445 = vunpack.c.l.b16 %v385
    %v446 = vunpack.c.l.b16 %v386
    %v447 = vpack.c.b16 %v440, %v439
    %v448 = vpack.c.b16 %v442, %v441
    %v449 = vpack.c.b16 %v444, %v443
    %v450 = vpack.c.b16 %v446, %v445
    %vm451 = vcmask 523264
    %v453 = vsel %vm451, %v447, 0
    %v456 = vsel %vm451, %v448, 0
    %v459 = vsel %vm451, %v449, 0
    %v462 = vsel %vm451, %v450, 0
    %464 = vmatpush.bf16.msra.mxu0 0
    %465 = vmatpush.bf16.msra.mxu0 0
    %466 = vmatpush.bf16.msra.mxu0 0
    %467 = vmatpush.bf16.msra.mxu0 0
    %468 = vmatpush.bf16.msra.mxu0 %v390
    %469 = vmatpush.bf16.msra.mxu0 %v389
    %470 = vmatpush.bf16.msra.mxu0 %v388
    %471 = vmatpush.bf16.msra.mxu0 %v387
    %472 = vmatmul.bf16.gmra.mxu0 %v453
    %v473 = vpop.f32.mrf.mxu0
    %v474 = vadd.f32 %v394, %v473
    %v475 = vpop.f32.mrf.mxu0
    %v476 = vadd.f32 %v399, %v475
    %477 = vmatmul.bf16.gmra.mxu0 %v456
    %v478 = vpop.f32.mrf.mxu0
    %v479 = vadd.f32 %v404, %v478
    %v480 = vpop.f32.mrf.mxu0
    %v481 = vadd.f32 %v409, %v480
    %482 = vmatmul.bf16.gmra.mxu0 %v459
    %v483 = vpop.f32.mrf.mxu0
    %v484 = vadd.f32 %v414, %v483
    %v485 = vpop.f32.mrf.mxu0
    %v486 = vadd.f32 %v419, %v485
    %487 = vmatmul.bf16.gmra.mxu0 %v462
    %v488 = vpop.f32.mrf.mxu0
    %v489 = vadd.f32 %v424, %v488
    %v490 = vpop.f32.mrf.mxu0
    %v491 = vadd.f32 %v429, %v490
    %492 = vdwg.mxu0
    %v493 = vmax.f32 %v474, 0.0
    %v494 = vmax.f32 %v476, 0.0
    %v495 = vmax.f32 %v479, 0.0
    %v496 = vmax.f32 %v481, 0.0
    %v497 = vmax.f32 %v484, 0.0
    %v498 = vmax.f32 %v486, 0.0
    %v499 = vmax.f32 %v489, 0.0
    %v500 = vmax.f32 %v491, 0.0
    %v501 = vld [vmem:[%s5] sm:$0x1]
    %v502 = vpack.c.bf16 %v494, %v493
    %v503 = vpack.c.bf16 %v496, %v495
    %v504 = vpack.c.bf16 %v498, %v497
    %v505 = vpack.c.bf16 %v500, %v499
    %507 = vset.pattern.permute.xlu0 0
    %508 = vperm.xlu0 %507, %v50
    %v509 = vpop.permute.xlu0 %508
    %v512 = vsel %vm451, %v501, 0
    %514 = vmatpush.bf16.msra.mxu0 0
    %515 = vmatpush.bf16.msra.mxu0 0
    %516 = vmatpush.bf16.msra.mxu0 0
    %517 = vmatpush.bf16.msra.mxu0 0
    %518 = vmatpush.bf16.msra.mxu0 %v505
    %519 = vmatpush.bf16.msra.mxu0 %v504
    %520 = vmatpush.bf16.msra.mxu0 %v503
    %521 = vmatpush.bf16.msra.mxu0 %v502
    %522 = vmatmul.bf16.gmra.mxu0 %v512
    %v523 = vpop.f32.mrf.mxu0
    %v524 = vadd.f32 %v509, %v523
    %v525 = vpop.f32.mrf.mxu0
    %526 = vdwg.mxu0
    %527 = vst [vmem:[#allocation2] sm:$0x1] %v524
    // Predicated region
    $region38: #{tpu_custom_call.1} parent=1 // pred_check
      _
    $region39: #{tpu_custom_call.1} parent=1 // pred_check_branch
      %529 = sbr.rel (0) target = $region41
    $region40: #{tpu_custom_call.1} parent=1 // pred_region
      %531 = vsyncadd [#allocation3], 0
      %s533 = sshll.u32 [#allocation2], 4
      %s534 = int_to_ptr.vmem [resolvable:$true] %s533
      %s535 = sshll.u32 %s9, 4
      %s536 = int_to_ptr.hbm [resolvable:$true] %s535
      %538 = dma.vmem_to_hbm [thread:$0]  %s534, 16, %s536, [#allocation3]
    $region41: #{tpu_custom_call.1} parent=1 // pred_fallthru
      _
    // Predicated region
    $region42: #{tpu_custom_call.1} parent=1 // pred_check
      _
    $region43: #{tpu_custom_call.1} parent=1 // pred_check_branch
      %540 = sbr.rel (0) target = $region45
    $region44: #{tpu_custom_call.1} parent=1 // pred_region
      %542 = dma.done [#allocation3], 16
    $region45: #{tpu_custom_call.1} parent=1 // pred_fallthru
      _
    %543 = vsyncpa [#allocation3], 1

</llo_original>
